<compile_context>
chip_gen: v7x
topology: tpu7x:2x2x1
jax: 0.10.0
libtpu: 0.0.40
codegen_flags: <defaults>
</compile_context>

<pallas_src>
import functools

import jax
import jax.numpy as jnp
from jax.experimental import pallas as pl
from jax.experimental.pallas import tpu as pltpu


def _cdiv(a, b):
    return -(-a // b)


def _round_up(n, m):
    return _cdiv(n, m) * m


def _vmem_capacity_bytes():
    """Physical VMEM of the current chip; conservative fallback if unknown."""
    try:
        info = pltpu.get_tpu_info()
        cap = int(getattr(info, "vmem_capacity_bytes", 0) or 0)
        if cap > 0:
            return cap
    except Exception:
        pass
    return 64 * 1024 * 1024  # v7x per-TensorCore VMEM: safe lower bound


def _footprint_bytes(tm, th, D, x_isz, out_isz, with_acc_scratch):
    """Conservative VMEM estimate: double-buffered tiles + live temporaries."""
    f = 2 * tm * D * x_isz              # x tiles (double-buffered)
    f += 2 * tm * D * out_isz           # out tiles
    f += 2 * D * th * 2                 # W1 tiles (bf16)
    f += 2 * th * D * 2                 # W2 tiles (bf16)
    f += 2 * (th + D) * 4               # bias tiles (f32)
    f += tm * th * (4 + 2)              # hidden activations: f32 + bf16 copy
    f += tm * D * 4                     # f32 second-matmul result before store
    if with_acc_scratch:
        f += tm * D * 4                 # explicit accumulator scratch
    return f


def _choose_config(N, D, H, x_isz, out_isz, force_mode=None):
    """Static (trace-time) tile / VMEM selection from chip capacity + shape."""
    vmem_cap = _vmem_capacity_bytes()
    vmem_limit = int(vmem_cap * 0.9)          # scoped limit requested from Mosaic
    budget = int(vmem_limit * 0.85)           # headroom for internal scratch

    big_vmem = vmem_cap >= 96 * 1024 * 1024   # v5e/v6e (128 MiB) vs v7x (64 MiB)
    target_tm = 1024 if big_vmem else 512

    # Row tile: multiple of 8 (sublane), >= 2 row tiles when N allows (feeds
    # both TensorCores on megacore parts), and preferably a divisor of N so
    # the wrapper never has to pad/slice the activations.
    if N <= 8:
        tm = N
    else:
        tm = max(8, min(target_tm, _round_up(_cdiv(N, 2), 8)))
        if N % tm != 0:
            divs = [d for d in range(8, min(tm, N) + 1, 8) if N % d == 0]
            if divs and divs[-1] >= max(8, tm // 2):
                tm = divs[-1]

    # Weights-resident fast path.
    if force_mode != "streamed":
        if (force_mode == "resident"
                or _footprint_bytes(tm, H, D, x_isz, out_isz, False) <= budget):
            return dict(mode="resident", tm=tm, th=H, vmem_limit=vmem_limit)

    # Streamed path: largest th that is a multiple of 128, divides H and fits.
    ths = sorted([t for t in range(128, H + 1, 128) if H % t == 0],
                 reverse=True) or [H]
    with_scratch = out_isz != 4
    for cur_tm in [tm, 512, 256, 128, 64, 32, 16, 8]:
        if cur_tm > tm or (N > 8 and cur_tm % 8 != 0):
            continue
        for t in ths:
            if _footprint_bytes(cur_tm, t, D, x_isz, out_isz, with_scratch) <= budget:
                return dict(mode="streamed", tm=cur_tm, th=t, vmem_limit=vmem_limit)
    return dict(mode="streamed", tm=8 if N > 8 else N, th=ths[-1],
                vmem_limit=vmem_limit)


def _mlp_resident_kernel(x_ref, w1_ref, b1_ref, w2_ref, b2_ref, o_ref, *,
                         approximate):
    """Whole MLP for one row tile; W1/W2 stay resident in VMEM across the grid."""
    x = x_ref[...].astype(w1_ref.dtype)                       # bf16 for the MXU
    h = jnp.dot(x, w1_ref[...], preferred_element_type=jnp.float32) + b1_ref[...]
    h = jax.nn.gelu(h, approximate=approximate)
    # Dropout(p=0.1): identity in eval mode.
    y = jnp.dot(h.astype(w2_ref.dtype), w2_ref[...],
                preferred_element_type=jnp.float32)
    y = jax.nn.gelu(y + b2_ref[...], approximate=approximate)
    # Dropout(p=0.1): identity in eval mode.
    o_ref[...] = y.astype(o_ref.dtype)


def _mlp_streamed_kernel(x_ref, w1_ref, b1_ref, w2_ref, b2_ref, o_ref, *scratch,
                         approximate):
    """H-tiled reduction.  Accumulates into o_ref (f32 out) or an f32 scratch."""
    acc_ref = scratch[0] if scratch else o_ref
    j = pl.program_id(1)

    @pl.when(j == 0)
    def _init():
        acc_ref[...] = jnp.zeros_like(acc_ref)

    x = x_ref[...].astype(w1_ref.dtype)
    h = jnp.dot(x, w1_ref[...], preferred_element_type=jnp.float32) + b1_ref[...]
    h = jax.nn.gelu(h, approximate=approximate)
    # Dropout(p=0.1): identity in eval mode.
    acc_ref[...] += jnp.dot(h.astype(w2_ref.dtype), w2_ref[...],
                            preferred_element_type=jnp.float32)

    @pl.when(j == pl.num_programs(1) - 1)
    def _finalize():
        y = jax.nn.gelu(acc_ref[...] + b2_ref[...], approximate=approximate)
        # Dropout(p=0.1): identity in eval mode.
        o_ref[...] = y.astype(o_ref.dtype)


@functools.partial(jax.jit, static_argnames=("approximate_gelu", "force_mode"))
def mlp_forward(x, w1, b1, w2, b2, *, approximate_gelu=True, force_mode=None):
    """y = GELU(GELU(x @ W1 + b1) @ W2 + b2); dropout is identity (eval mode).

    x: (..., D).  W1: (D, 2D), W2: (2D, D) stored as (in, out); biases (1, out).
    Weights should be stored in bf16 at the model level (MXU-native); the
    fallback cast below only runs for other dtypes.
    """
    D = x.shape[-1]
    H = w1.shape[1]                               # = 2 * D
    lead = x.shape[:-1]
    N = 1
    for s in lead:
        N *= s
    x2d = x.reshape(N, D)

    w1_b = w1 if w1.dtype == jnp.bfloat16 else w1.astype(jnp.bfloat16)
    w2_b = w2 if w2.dtype == jnp.bfloat16 else w2.astype(jnp.bfloat16)
    b1_f = b1.reshape(1, H).astype(jnp.float32)
    b2_f = b2.reshape(1, D).astype(jnp.float32)

    out_dtype = x.dtype                           # bf16 in -> bf16 out
    x_isz = x.dtype.itemsize
    out_isz = jnp.dtype(out_dtype).itemsize

    cfg = _choose_config(N, D, H, x_isz, out_isz, force_mode)
    tm, th, vmem_limit = cfg["tm"], cfg["th"], cfg["vmem_limit"]

    n_row = _cdiv(N, tm)
    Np = n_row * tm
    if Np != N:                                   # fallback only; tm prefers divisors
        x2d = jnp.pad(x2d, ((0, Np - N), (0, 0)))
    n_h = H // th

    weight_streams = 1 if cfg["mode"] == "resident" else n_row
    cost = pl.CostEstimate(
        flops=4 * Np * D * H,                     # two (N, D, H) matmuls
        transcendentals=Np * (H + D),             # one tanh per GELU output
        bytes_accessed=(Np * D * x_isz + Np * D * out_isz
                        + weight_streams * 4 * D * H    # bf16 W1+W2 per row tile
                        + (H + D) * 4))

    if cfg["mode"] == "resident":
        kernel = functools.partial(_mlp_resident_kernel,
                                   approximate=approximate_gelu)
        grid = (n_row,)
        in_specs = [
            pl.BlockSpec((tm, D), lambda i: (i, 0)),    # x row tile
            pl.BlockSpec((D, H), lambda i: (0, 0)),     # W1 (resident)
            pl.BlockSpec((1, H), lambda i: (0, 0)),     # b1
            pl.BlockSpec((H, D), lambda i: (0, 0)),     # W2 (resident)
            pl.BlockSpec((1, D), lambda i: (0, 0)),     # b2
        ]
        out_specs = pl.BlockSpec((tm, D), lambda i: (i, 0))
        scratch_shapes = []
        dim_sem = ("parallel",)
    else:
        kernel = functools.partial(_mlp_streamed_kernel,
                                   approximate=approximate_gelu)
        grid = (n_row, n_h)                        # reduction axis (H) last
        in_specs = [
            pl.BlockSpec((tm, D), lambda i, j: (i, 0)),  # x row tile
            pl.BlockSpec((D, th), lambda i, j: (0, j)),  # W1 H-chunk
            pl.BlockSpec((1, th), lambda i, j: (0, j)),  # b1 H-chunk
            pl.BlockSpec((th, D), lambda i, j: (j, 0)),  # W2 H-chunk
            pl.BlockSpec((1, D), lambda i, j: (0, 0)),   # b2
        ]
        out_specs = pl.BlockSpec((tm, D), lambda i, j: (i, 0))
        # f32 output -> accumulate directly in o_ref (no scratch); else scratch.
        scratch_shapes = ([] if out_dtype == jnp.float32
                          else [pltpu.VMEM((tm, D), jnp.float32)])
        dim_sem = ("parallel", "arbitrary")

    out2d = pl.pallas_call(
        kernel,
        out_shape=jax.ShapeDtypeStruct((Np, D), out_dtype),
        grid_spec=pltpu.PrefetchScalarGridSpec(
            num_scalar_prefetch=0,
            grid=grid,
            in_specs=in_specs,
            out_specs=out_specs,
            scratch_shapes=scratch_shapes),
        compiler_params=pltpu.CompilerParams(
            dimension_semantics=dim_sem,
            vmem_limit_bytes=vmem_limit),
        cost_estimate=cost,
    )(x2d, w1_b, b1_f, w2_b, b2_f)

    if Np != N:
        out2d = out2d[:N]
    return out2d.reshape(*lead, D)


def _init_params(key, project_dim):
    """torch.nn.Linear-style init; weights stored bf16 (model-level), biases f32."""
    D, H = project_dim, 2 * project_dim
    k1, k2, k3, k4 = jax.random.split(key, 4)
    lim1 = 1.0 / jnp.sqrt(D)
    lim2 = 1.0 / jnp.sqrt(H)
    w1 = jax.random.uniform(k1, (D, H), jnp.float32, -lim1, lim1).astype(jnp.bfloat16)
    b1 = jax.random.uniform(k2, (1, H), jnp.float32, -lim1, lim1)
    w2 = jax.random.uniform(k3, (H, D), jnp.float32, -lim2, lim2).astype(jnp.bfloat16)
    b2 = jax.random.uniform(k4, (1, D), jnp.float32, -lim2, lim2)
    return w1, b1, w2, b2


if __name__ == "__main__":
    key = jax.random.PRNGKey(0)
    kx, kp = jax.random.split(key)

    B, S, D = 2, 8, 32  # batch, sequence, project_dim
    x = jax.random.normal(kx, (B, S, D), jnp.float32)
    w1, b1, w2, b2 = _init_params(kp, D)

    # Reference: plain JAX f32 with exact (erf) GELU, matching torch.nn.GELU().
    # Tolerance accounts for the bf16 MXU path + tanh-GELU in the kernel.
    w1f, w2f = w1.astype(jnp.float32), w2.astype(jnp.float32)

    def ref(x2d):
        h = jax.nn.gelu(x2d @ w1f + b1, approximate=False)
        return jax.nn.gelu(h @ w2f + b2, approximate=False)

    ref_out = ref(x.reshape(B * S, D)).reshape(B, S, D)

    # 1) Default path (weights-resident fast path at this size).
    out = jax.block_until_ready(mlp_forward(x, w1, b1, w2, b2))
    assert out.shape == ref_out.shape
    assert jnp.allclose(out, ref_out, atol=5e-2, rtol=5e-2), "resident path mismatch"

    # 2) Streamed (H-tiled) path, f32 output -> accumulate directly into o_ref.
    out_s = jax.block_until_ready(
        mlp_forward(x, w1, b1, w2, b2, force_mode="streamed"))
    assert jnp.allclose(out_s, ref_out, atol=5e-2, rtol=5e-2), "streamed path mismatch"

    # 3) Streamed path with bf16 activations -> f32 scratch accumulator, bf16 out.
    out_b = jax.block_until_ready(
        mlp_forward(x.astype(jnp.bfloat16), w1, b1, w2, b2, force_mode="streamed"))
    assert out_b.dtype == jnp.bfloat16
    assert jnp.allclose(out_b.astype(jnp.float32), ref_out, atol=1e-1, rtol=1e-1), \
        "bf16 streamed path mismatch"

    print("KERNEL_OK")
</pallas_src>

<mosaic_0001>
module attributes {stable_mosaic.version = 11 : i64} {
  func.func @_mlp_resident_kernel(%arg0: i32, %arg1: memref<8x32xf32, #tpu.memory_space<vmem>>, %arg2: memref<32x64xbf16, #tpu.memory_space<vmem>>, %arg3: memref<1x64xf32, #tpu.memory_space<vmem>>, %arg4: memref<64x32xbf16, #tpu.memory_space<vmem>>, %arg5: memref<1x32xf32, #tpu.memory_space<vmem>>, %arg6: memref<8x32xf32, #tpu.memory_space<vmem>>) attributes {dimension_semantics = [#tpu.dimension_semantics<parallel>], iteration_bounds = array<i64: 2>, scalar_prefetch = 0 : i64, scratch_operands = 0 : i64, tpu.core_type = #tpu.core_type<tc>, window_params = [{transform_indices = @transform_0, window_bounds = array<i64: 8, 32>}, {pipeline_mode = #tpu.pipeline_mode<synchronous>, transform_indices = @transform_1, window_bounds = array<i64: 32, 64>}, {pipeline_mode = #tpu.pipeline_mode<synchronous>, transform_indices = @transform_2, window_bounds = array<i64: 1, 64>}, {pipeline_mode = #tpu.pipeline_mode<synchronous>, transform_indices = @transform_3, window_bounds = array<i64: 64, 32>}, {pipeline_mode = #tpu.pipeline_mode<synchronous>, transform_indices = @transform_4, window_bounds = array<i64: 1, 32>}, {transform_indices = @transform_5, window_bounds = array<i64: 8, 32>}]} {
    %c0 = arith.constant 0 : index
    %c0_0 = arith.constant 0 : index
    %0 = vector.load %arg1[%c0, %c0_0] : memref<8x32xf32, #tpu.memory_space<vmem>>, vector<8x32xf32>
    %1 = arith.truncf %0 : vector<8x32xf32> to vector<8x32xbf16>
    %c0_1 = arith.constant 0 : index
    %c0_2 = arith.constant 0 : index
    %2 = vector.load %arg2[%c0_1, %c0_2] : memref<32x64xbf16, #tpu.memory_space<vmem>>, vector<32x64xbf16>
    %cst = arith.constant dense<0.000000e+00> : vector<8x64xf32>
    %3 = tpu.matmul %1, %2, %cst {dimension_numbers = #tpu.dot_dimension_numbers<[1], [0], [0], [1], [0, 0, 1, 1], [], []>} : vector<8x32xbf16>, vector<32x64xbf16>, vector<8x64xf32> -> vector<8x64xf32>
    %c0_3 = arith.constant 0 : index
    %c0_4 = arith.constant 0 : index
    %4 = vector.load %arg3[%c0_3, %c0_4] : memref<1x64xf32, #tpu.memory_space<vmem>>, vector<1x64xf32>
    %5 = vector.broadcast %4 : vector<1x64xf32> to vector<8x64xf32>
    %6 = arith.addf %3, %5 : vector<8x64xf32>
    %7 = arith.mulf %6, %6 : vector<8x64xf32>
    %8 = arith.mulf %6, %7 : vector<8x64xf32>
    %cst_5 = arith.constant 4.471500e-02 : f32
    %9 = vector.broadcast %cst_5 : f32 to vector<8x64xf32>
    %10 = arith.mulf %9, %8 : vector<8x64xf32>
    %11 = arith.addf %6, %10 : vector<8x64xf32>
    %cst_6 = arith.constant 0.797884583 : f32
    %12 = vector.broadcast %cst_6 : f32 to vector<8x64xf32>
    %13 = arith.mulf %12, %11 : vector<8x64xf32>
    %14 = math.tanh %13 : vector<8x64xf32>
    %cst_7 = arith.constant 1.000000e+00 : f32
    %15 = vector.broadcast %cst_7 : f32 to vector<8x64xf32>
    %16 = arith.addf %15, %14 : vector<8x64xf32>
    %cst_8 = arith.constant 5.000000e-01 : f32
    %17 = vector.broadcast %cst_8 : f32 to vector<8x64xf32>
    %18 = arith.mulf %17, %16 : vector<8x64xf32>
    %19 = arith.mulf %6, %18 : vector<8x64xf32>
    %20 = arith.truncf %19 : vector<8x64xf32> to vector<8x64xbf16>
    %c0_9 = arith.constant 0 : index
    %c0_10 = arith.constant 0 : index
    %21 = vector.load %arg4[%c0_9, %c0_10] : memref<64x32xbf16, #tpu.memory_space<vmem>>, vector<64x32xbf16>
    %cst_11 = arith.constant dense<0.000000e+00> : vector<8x32xf32>
    %22 = tpu.matmul %20, %21, %cst_11 {dimension_numbers = #tpu.dot_dimension_numbers<[1], [0], [0], [1], [0, 0, 1, 1], [], []>} : vector<8x64xbf16>, vector<64x32xbf16>, vector<8x32xf32> -> vector<8x32xf32>
    %c0_12 = arith.constant 0 : index
    %c0_13 = arith.constant 0 : index
    %23 = vector.load %arg5[%c0_12, %c0_13] : memref<1x32xf32, #tpu.memory_space<vmem>>, vector<1x32xf32>
    %24 = vector.broadcast %23 : vector<1x32xf32> to vector<8x32xf32>
    %25 = arith.addf %22, %24 : vector<8x32xf32>
    %26 = arith.mulf %25, %25 : vector<8x32xf32>
    %27 = arith.mulf %25, %26 : vector<8x32xf32>
    %cst_14 = arith.constant 4.471500e-02 : f32
    %28 = vector.broadcast %cst_14 : f32 to vector<8x32xf32>
    %29 = arith.mulf %28, %27 : vector<8x32xf32>
    %30 = arith.addf %25, %29 : vector<8x32xf32>
    %cst_15 = arith.constant 0.797884583 : f32
    %31 = vector.broadcast %cst_15 : f32 to vector<8x32xf32>
    %32 = arith.mulf %31, %30 : vector<8x32xf32>
    %33 = math.tanh %32 : vector<8x32xf32>
    %cst_16 = arith.constant 1.000000e+00 : f32
    %34 = vector.broadcast %cst_16 : f32 to vector<8x32xf32>
    %35 = arith.addf %34, %33 : vector<8x32xf32>
    %cst_17 = arith.constant 5.000000e-01 : f32
    %36 = vector.broadcast %cst_17 : f32 to vector<8x32xf32>
    %37 = arith.mulf %36, %35 : vector<8x32xf32>
    %38 = arith.mulf %25, %37 : vector<8x32xf32>
    %c0_18 = arith.constant 0 : index
    %c0_19 = arith.constant 0 : index
    %39 = vector.load %arg6[%c0_18, %c0_19] : memref<8x32xf32, #tpu.memory_space<vmem>>, vector<8x32xf32>
    tpu.vector_store %arg6[%c0_18, %c0_19], %38 {strides = array<i32>} : memref<8x32xf32, #tpu.memory_space<vmem>>, vector<8x32xf32>,
    return
  }
  func.func @transform_0(%arg0: i32) -> (i32, i32) {
    %c0_i32 = arith.constant 0 : i32
    %c0_i32_0 = arith.constant 0 : i32
    return %arg0, %c0_i32 : i32, i32
  }
  func.func @transform_1(%arg0: i32) -> (i32, i32) {
    %c0_i32 = arith.constant 0 : i32
    %c0_i32_0 = arith.constant 0 : i32
    %c0_i32_1 = arith.constant 0 : i32
    return %c0_i32, %c0_i32_0 : i32, i32
  }
  func.func @transform_2(%arg0: i32) -> (i32, i32) {
    %c0_i32 = arith.constant 0 : i32
    %c0_i32_0 = arith.constant 0 : i32
    %c0_i32_1 = arith.constant 0 : i32
    return %c0_i32, %c0_i32_0 : i32, i32
  }
  func.func @transform_3(%arg0: i32) -> (i32, i32) {
    %c0_i32 = arith.constant 0 : i32
    %c0_i32_0 = arith.constant 0 : i32
    %c0_i32_1 = arith.constant 0 : i32
    return %c0_i32, %c0_i32_0 : i32, i32
  }
  func.func @transform_4(%arg0: i32) -> (i32, i32) {
    %c0_i32 = arith.constant 0 : i32
    %c0_i32_0 = arith.constant 0 : i32
    %c0_i32_1 = arith.constant 0 : i32
    return %c0_i32, %c0_i32_0 : i32, i32
  }
  func.func @transform_5(%arg0: i32) -> (i32, i32) {
    %c0_i32 = arith.constant 0 : i32
    %c0_i32_0 = arith.constant 0 : i32
    return %arg0, %c0_i32 : i32, i32
  }
}

</mosaic_0001>

<llo_original>
// kernel: mlp_forward.1
$region0: #{mlp_forward.1}
  #allocation0 [shape = 'u32[]', space=smem, size = 0x4, offset = 0x4, fixed_abs, tag = 'smem constant byte address 0x4 - core index']
  #allocation1 [shape = 'u32[144,128]{1,0:T(1,128)}', space=vmem, size = 0x12000, scoped, tag = 'internal scratch']
  %s0 = inlined_call_operand.vmem [shape: f32[16,32], index: 0, kind: input, shape index: {}]
  %s1 = inlined_call_operand.vmem [shape: bf16[32,64], index: 1, kind: input, shape index: {}]
  %s2 = inlined_call_operand.vmem [shape: f32[1,64], index: 2, kind: input, shape index: {}]
  %s3 = inlined_call_operand.vmem [shape: bf16[64,32], index: 3, kind: input, shape index: {}]
  %s4 = inlined_call_operand.vmem [shape: f32[1,32], index: 4, kind: input, shape index: {}]
  %s5 = inlined_call_operand.hbm [shape: f32[16,32], index: 5, kind: output, shape index: {}]
  %s6 = sld [smem:[#allocation0]]
  $region53: #{mlp_forward.1} parent=0
    _
  %s8 = ssub.s32 1, %s6
  %s9 = scalar_select 0, %s8, %s6
  $region1: #{mlp_forward.1} parent=0
    #allocation2 [shape = 'u8[8192]{0}', space=vmem, size = 0x2000, scoped, tag = 'output window, operand 0']
    #allocation3 [shape = 's32[2]{0}', space=sflag, size = 0x8, scoped, tag = 'scoped memory for mlp_forward.1']
    %10 = vsyncpa [#allocation3], 0
    %s11 = scalar_lea.sflag [#allocation3], 1
    %12 = vsyncpa %s11, 0
    loop: start=0, step=1, limit=4
    $region2: #{mlp_forward.1} parent=1 // loop_pre_header
      _
    $region3: #{mlp_forward.1} parent=1 // loop_header
      %s14 = sphi 0, %s18
      %p15 = scmp.ge.s32.totalorder %s14, 4
      %s24 = sphi 0, %s26
      %s27 = sphi 0, %s24
      %s28 = sphi 0, %s27
      %s44 = sphi 0, %s28
      %s48 = sphi 0, %s48
      %s50 = sphi 0, %s48
      %s51 = sphi 0, %s50
      %s65 = sphi 0, %s51
      %s69 = sphi 0, %s69
      %s71 = sphi 0, %s69
      %s72 = sphi 0, %s71
      %s86 = sphi 0, %s72
      %s90 = sphi 0, %s90
      %s92 = sphi 0, %s90
      %s93 = sphi 0, %s92
      %s107 = sphi 0, %s93
      %s111 = sphi 0, %s111
      %s113 = sphi 0, %s111
      %s114 = sphi 0, %s113
      %s128 = sphi 0, %s114
      %s134 = sphi 0, %s136
      %s137 = sphi 0, %s134
      %s138 = sphi 0, %s137
      %s154 = sphi 0, %s138
    $region4: #{mlp_forward.1} parent=1 // loop_header_branch
      %17 = sbr.rel (%p15) target = $region8
    $region5: #{mlp_forward.1} parent=1 // loop_body
      %s19 = ssub.s32 %s14, 1
      %s20 = ssub.s32 %s14, 2
      %s21 = sadd.s32 %s14, 1
      %s22 = ssub.s32 %s14, %s21
      %p23 = scmp.eq.s32.totalorder %s22, 0
      %s25 = sadd.s32 %s24, 1
      %s26 = scalar_select %p23, %s24, %s25
      %p29 = pneg %p23
      %p30 = scmp.eq.s32.totalorder %s14, 1
      %p31 = por %p29, %p30
      %p32 = scmp.ne.s32.totalorder %s24, %s27
      %p33 = scmp.eq.s32.totalorder %s14, 0
      %p34 = por %p32, %p33
      %p35 = scmp.ne.s32.totalorder %s24, %s27
      %p36 = scmp.eq.s32.totalorder %s19, 1
      %p37 = por %p35, %p36
      %p38 = scmp.ne.s32.totalorder %s27, %s28
      %p39 = scmp.eq.s32.totalorder %s19, 0
      %p40 = por %p38, %p39
      %p41 = scmp.ne.s32.totalorder %s27, %s28
      %p42 = scmp.eq.s32.totalorder %s20, 1
      %p43 = por %p41, %p42
      %p45 = scmp.ne.s32.totalorder %s28, %s44
      %p46 = scmp.eq.s32.totalorder %s20, 0
      %p47 = por %p45, %p46
      %s49 = sadd.s32 %s48, 1
      %p52 = scmp.eq.s32.totalorder %s14, 1
      %p53 = scmp.ne.s32.totalorder %s48, %s50
      %p54 = scmp.eq.s32.totalorder %s14, 0
      %p55 = por %p53, %p54
      %p56 = scmp.ne.s32.totalorder %s48, %s50
      %p57 = scmp.eq.s32.totalorder %s19, 1
      %p58 = por %p56, %p57
      %p59 = scmp.ne.s32.totalorder %s50, %s51
      %p60 = scmp.eq.s32.totalorder %s19, 0
      %p61 = por %p59, %p60
      %p62 = scmp.ne.s32.totalorder %s50, %s51
      %p63 = scmp.eq.s32.totalorder %s20, 1
      %p64 = por %p62, %p63
      %p66 = scmp.ne.s32.totalorder %s51, %s65
      %p67 = scmp.eq.s32.totalorder %s20, 0
      %p68 = por %p66, %p67
      %s70 = sadd.s32 %s69, 1
      %p73 = scmp.eq.s32.totalorder %s14, 1
      %p74 = scmp.ne.s32.totalorder %s69, %s71
      %p75 = scmp.eq.s32.totalorder %s14, 0
      %p76 = por %p74, %p75
      %p77 = scmp.ne.s32.totalorder %s69, %s71
      %p78 = scmp.eq.s32.totalorder %s19, 1
      %p79 = por %p77, %p78
      %p80 = scmp.ne.s32.totalorder %s71, %s72
      %p81 = scmp.eq.s32.totalorder %s19, 0
      %p82 = por %p80, %p81
      %p83 = scmp.ne.s32.totalorder %s71, %s72
      %p84 = scmp.eq.s32.totalorder %s20, 1
      %p85 = por %p83, %p84
      %p87 = scmp.ne.s32.totalorder %s72, %s86
      %p88 = scmp.eq.s32.totalorder %s20, 0
      %p89 = por %p87, %p88
      %s91 = sadd.s32 %s90, 1
      %p94 = scmp.eq.s32.totalorder %s14, 1
      %p95 = scmp.ne.s32.totalorder %s90, %s92
      %p96 = scmp.eq.s32.totalorder %s14, 0
      %p97 = por %p95, %p96
      %p98 = scmp.ne.s32.totalorder %s90, %s92
      %p99 = scmp.eq.s32.totalorder %s19, 1
      %p100 = por %p98, %p99
      %p101 = scmp.ne.s32.totalorder %s92, %s93
      %p102 = scmp.eq.s32.totalorder %s19, 0
      %p103 = por %p101, %p102
      %p104 = scmp.ne.s32.totalorder %s92, %s93
      %p105 = scmp.eq.s32.totalorder %s20, 1
      %p106 = por %p104, %p105
      %p108 = scmp.ne.s32.totalorder %s93, %s107
      %p109 = scmp.eq.s32.totalorder %s20, 0
      %p110 = por %p108, %p109
      %s112 = sadd.s32 %s111, 1
      %p115 = scmp.eq.s32.totalorder %s14, 1
      %p116 = scmp.ne.s32.totalorder %s111, %s113
      %p117 = scmp.eq.s32.totalorder %s14, 0
      %p118 = por %p116, %p117
      %p119 = scmp.ne.s32.totalorder %s111, %s113
      %p120 = scmp.eq.s32.totalorder %s19, 1
      %p121 = por %p119, %p120
      %p122 = scmp.ne.s32.totalorder %s113, %s114
      %p123 = scmp.eq.s32.totalorder %s19, 0
      %p124 = por %p122, %p123
      %p125 = scmp.ne.s32.totalorder %s113, %s114
      %p126 = scmp.eq.s32.totalorder %s20, 1
      %p127 = por %p125, %p126
      %p129 = scmp.ne.s32.totalorder %s114, %s128
      %p130 = scmp.eq.s32.totalorder %s20, 0
      %p131 = por %p129, %p130
      %s132 = ssub.s32 %s14, %s21
      %p133 = scmp.eq.s32.totalorder %s132, 0
      %s135 = sadd.s32 %s134, 1
      %s136 = scalar_select %p133, %s134, %s135
      %p139 = pneg %p133
      %p140 = scmp.eq.s32.totalorder %s14, 1
      %p141 = por %p139, %p140
      %p142 = scmp.ne.s32.totalorder %s134, %s137
      %p143 = scmp.eq.s32.totalorder %s14, 0
      %p144 = por %p142, %p143
      %p145 = scmp.ne.s32.totalorder %s134, %s137
      %p146 = scmp.eq.s32.totalorder %s19, 1
      %p147 = por %p145, %p146
      %p148 = scmp.ne.s32.totalorder %s137, %s138
      %p149 = scmp.eq.s32.totalorder %s19, 0
      %p150 = por %p148, %p149
      %p151 = scmp.ne.s32.totalorder %s137, %s138
      %p152 = scmp.eq.s32.totalorder %s20, 1
      %p153 = por %p151, %p152
      %p155 = scmp.ne.s32.totalorder %s138, %s154
      %p156 = scmp.eq.s32.totalorder %s20, 0
      %p157 = por %p155, %p156
      %p158 = scmp.le.s32.totalorder 1, %s14
      %p159 = scmp.lt.s32.totalorder %s14, 3
      %p160 = pnand %p158, %p159
      %p161 = pneg %p160
      // Predicated region
      $region9: #{mlp_forward.1} parent=5 // pred_check
        _
      $region10: #{mlp_forward.1} parent=5 // pred_check_branch
        %163 = sbr.rel (%p160) target = $region12
      $region11: #{mlp_forward.1} parent=5 // pred_region
        %s164 = ssub.s32 %s14, 1
        // Predicated region
        $region13: #{mlp_forward.1} parent=11 // pred_check
          %p165 = pneg %p61
        $region14: #{mlp_forward.1} parent=11 // pred_check_branch
          %167 = sbr.rel (%p165) target = $region16
        $region15: #{mlp_forward.1} parent=11 // pred_region
          _
        $region16: #{mlp_forward.1} parent=11 // pred_fallthru
          _
        // Predicated region
        $region17: #{mlp_forward.1} parent=11 // pred_check
          %p168 = pneg %p82
        $region18: #{mlp_forward.1} parent=11 // pred_check_branch
          %170 = sbr.rel (%p168) target = $region20
        $region19: #{mlp_forward.1} parent=11 // pred_region
          _
        $region20: #{mlp_forward.1} parent=11 // pred_fallthru
          _
        // Predicated region
        $region21: #{mlp_forward.1} parent=11 // pred_check
          %p171 = pneg %p103
        $region22: #{mlp_forward.1} parent=11 // pred_check_branch
          %173 = sbr.rel (%p171) target = $region24
        $region23: #{mlp_forward.1} parent=11 // pred_region
          _
        $region24: #{mlp_forward.1} parent=11 // pred_fallthru
          _
        // Predicated region
        $region25: #{mlp_forward.1} parent=11 // pred_check
          %p174 = pneg %p124
        $region26: #{mlp_forward.1} parent=11 // pred_check_branch
          %176 = sbr.rel (%p174) target = $region28
        $region27: #{mlp_forward.1} parent=11 // pred_region
          _
        $region28: #{mlp_forward.1} parent=11 // pred_fallthru
          _
      $region12: #{mlp_forward.1} parent=5 // pred_fallthru
        _
      %p177 = scmp.lt.s32.totalorder %s14, 2
      // Predicated region
      $region29: #{mlp_forward.1} parent=5 // pred_check
        %p178 = pneg %p177
      $region30: #{mlp_forward.1} parent=5 // pred_check_branch
        %180 = sbr.rel (%p178) target = $region32
      $region31: #{mlp_forward.1} parent=5 // pred_region
        // Predicated region
        $region33: #{mlp_forward.1} parent=31 // pred_check
          %p181 = pneg %p34
        $region34: #{mlp_forward.1} parent=31 // pred_check_branch
          %183 = sbr.rel (%p181) target = $region36
        $region35: #{mlp_forward.1} parent=31 // pred_region
          %p184 = scmp.lt.s32.totalorder %s14, 1
          %s185 = scalar_select %p184, %s14, 1
          %s186 = smul.addr %s185, 8
          %s187 = scalar_lea.vmem %s0, %s186
        $region36: #{mlp_forward.1} parent=31 // pred_fallthru
          _
      $region32: #{mlp_forward.1} parent=5 // pred_fallthru
        _
      %p188 = scmp.le.s32.totalorder 1, %s14
      %p189 = scmp.lt.s32.totalorder %s14, 3
      %p190 = pnand %p188, %p189
      %p191 = pneg %p190
      // Predicated region
      $region37: #{mlp_forward.1} parent=5 // pred_check
        _
      $region38: #{mlp_forward.1} parent=5 // pred_check_branch
        %193 = sbr.rel (%p190) target = $region40
      $region39: #{mlp_forward.1} parent=5 // pred_region
        %s194 = ssub.s32 %s14, 1
        %p195 = scmp.lt.s32.totalorder %s19, 1
        %s196 = scalar_select %p195, %s19, 1
        %s197 = smul.addr %s196, 8
        %s198 = scalar_lea.vmem %s0, %s197
        %p199 = pneg %p40
        %p200 = pneg %p37
        %p201 = pneg %p61
        %p202 = pneg %p58
        %p203 = pneg %p82
        %p204 = pneg %p79
        %p205 = pneg %p103
        %p206 = pneg %p100
        %p207 = pneg %p124
        %p208 = pneg %p121
        %p209 = pneg %p150
        %p210 = pneg %p147
        %s211 = sand.u32 %s137, 1
        %s212 = scalar_lea.sflag [#allocation3], %s211
        %s213 = sand.u32 %s137, 1
        %s214 = smul.addr %s213, 8
        %s215 = scalar_lea.vmem [#allocation2], %s214
        %p216 = scmp.lt.s32.totalorder %s19, 1
        %s217 = scalar_select %p216, %s19, 1
        %s218 = smul.addr %s217, 8
        %s219 = scalar_lea.vmem %s0, %s218
        %v221 = vld [vmem:[%s219] sm:$0xff]
        %v222 = vpack.c.bf16 %v221, %v221
        %v223 = vld [vmem:[%s1] sm:$0xf]
        %v224 = vld [vmem:[%s1 + $0x4] sm:$0xf]
        %v225 = vld [vmem:[%s1 + $0x8] sm:$0xf]
        %v226 = vld [vmem:[%s1 + $0xc] sm:$0xf]
        %v227 = vld [vmem:[%s2] sm:$0x1]
        %v229 = vlaneseq
        %v230 = vshrl.u32 %v229, 7
        %v231 = vsub.s32 0, %v230
        %v232 = vrot.slane %v227, %v231
        %v238 = vunpack.c.l.b16 %v223
        %v239 = vunpack.c.l.b16 %v224
        %v240 = vunpack.c.l.b16 %v225
        %v241 = vunpack.c.l.b16 %v226
        %v242 = vpack.c.b16 %v239, %v238
        %v243 = vpack.c.b16 %v241, %v240
        %vm246 = vcmask 261120
        %v248 = vsel %vm246, %v222, 0
        %250 = vmatprep.subr.bf16.mxu0 0
        %251 = vmatpush1.bf16.msra.mxu0 %v242
        %252 = vmatprep.subr.bf16.mxu0 0
        %253 = vmatpush1.bf16.msra.mxu0 %v243
        %254 = vmatprep.subr.bf16.mxu0 0
        %255 = vmatpush1.bf16.msra.mxu0 0
        %256 = vmatprep.subr.bf16.mxu0 0
        %257 = vmatpush1.bf16.msra.mxu0 0
        %258 = vmatprep.subr.bf16.mxu0 0
        %259 = vmatpush1.bf16.msra.mxu0 0
        %260 = vmatprep.subr.bf16.mxu0 0
        %261 = vmatpush1.bf16.msra.mxu0 0
        %262 = vmatprep.subr.bf16.mxu0 0
        %263 = vmatpush1.bf16.msra.mxu0 0
        %264 = vmatprep.subr.bf16.mxu0 0
        %265 = vmatpush1.bf16.msra.mxu0 0
        %266 = vmatprep.subr.bf16.mxu0 0
        %267 = vmatpush1.bf16.msra.mxu0 0
        %268 = vmatprep.subr.bf16.mxu0 0
        %269 = vmatpush1.bf16.msra.mxu0 0
        %270 = vmatprep.subr.bf16.mxu0 0
        %271 = vmatpush1.bf16.msra.mxu0 0
        %272 = vmatprep.subr.bf16.mxu0 0
        %273 = vmatpush1.bf16.msra.mxu0 0
        %274 = vmatprep.subr.bf16.mxu0 0
        %275 = vmatpush1.bf16.msra.mxu0 0
        %276 = vmatprep.subr.bf16.mxu0 0
        %277 = vmatpush1.bf16.msra.mxu0 0
        %278 = vmatprep.subr.bf16.mxu0 0
        %279 = vmatpush1.bf16.msra.mxu0 0
        %280 = vmatprep.subr.bf16.mxu0 0
        %281 = vmatpush1.bf16.msra.mxu0 0
        %282 = vmatprep.mubr.bf16.mxu0 0
        %283 = vmatmul.mubr.bf16.gmra.mrb[0].mxu0 %v248
        %v284 = vpop.f32.mrb[0].mxu0
        %v285 = vadd.f32 %v232, %v284
        %v286 = vpop.f32.mrb[0].mxu0
        %v287 = vpop.f32.mrb[0].mxu0
        %v288 = vpop.f32.mrb[0].mxu0
        %289 = vdwg.mxu0
        %v290 = vmul.f32 %v285, %v285
        %v291 = vmul.f32 %v285, %v290
        %v292 = vmul.f32 %v291, 0.044715
        %v293 = vadd.f32 %v285, %v292
        %v294 = vmul.f32 %v293, 0.7978846
        %v295 = vtanh.pop %v294
        %v296 = vadd.f32 %v295, 1.0
        %v297 = vmul.f32 %v296, 0.5
        %v298 = vmul.f32 %v285, %v297
        %v299 = vpack.c.bf16 %v298, %v298
        %v300 = vld [vmem:[%s3] sm:$0xf]
        %v301 = vld [vmem:[%s3 + $0x4] sm:$0xf]
        %v302 = vld [vmem:[%s3 + $0x8] sm:$0xf]
        %v303 = vld [vmem:[%s3 + $0xc] sm:$0xf]
        %v304 = vld [vmem:[%s3 + $0x10] sm:$0xf]
        %v305 = vld [vmem:[%s3 + $0x14] sm:$0xf]
        %v306 = vld [vmem:[%s3 + $0x18] sm:$0xf]
        %v307 = vld [vmem:[%s3 + $0x1c] sm:$0xf]
        %v308 = vld [vmem:[%s4] sm:$0x1]
        %v310 = vlaneseq
        %v311 = vshrl.u32 %v310, 7
        %v312 = vsub.s32 0, %v311
        %v313 = vrot.slane %v308, %v312
        %v323 = vunpack.c.l.b16 %v300
        %v324 = vunpack.c.l.b16 %v301
        %v325 = vunpack.c.l.b16 %v302
        %v326 = vunpack.c.l.b16 %v303
        %v327 = vunpack.c.l.b16 %v304
        %v328 = vunpack.c.l.b16 %v305
        %v329 = vunpack.c.l.b16 %v306
        %v330 = vunpack.c.l.b16 %v307
        %v331 = vpack.c.b16 %v324, %v323
        %v332 = vpack.c.b16 %v326, %v325
        %v333 = vpack.c.b16 %v328, %v327
        %v334 = vpack.c.b16 %v330, %v329
        %vm339 = vcmask 523264
        %v341 = vsel %vm339, %v299, 0
        %343 = vmatprep.subr.bf16.mxu0 0
        %344 = vmatpush1.bf16.msra.mxu0 %v331
        %345 = vmatprep.subr.bf16.mxu0 0
        %346 = vmatpush1.bf16.msra.mxu0 %v332
        %347 = vmatprep.subr.bf16.mxu0 0
        %348 = vmatpush1.bf16.msra.mxu0 %v333
        %349 = vmatprep.subr.bf16.mxu0 0
        %350 = vmatpush1.bf16.msra.mxu0 %v334
        %351 = vmatprep.subr.bf16.mxu0 0
        %352 = vmatpush1.bf16.msra.mxu0 0
        %353 = vmatprep.subr.bf16.mxu0 0
        %354 = vmatpush1.bf16.msra.mxu0 0
        %355 = vmatprep.subr.bf16.mxu0 0
        %356 = vmatpush1.bf16.msra.mxu0 0
        %357 = vmatprep.subr.bf16.mxu0 0
        %358 = vmatpush1.bf16.msra.mxu0 0
        %359 = vmatprep.subr.bf16.mxu0 0
        %360 = vmatpush1.bf16.msra.mxu0 0
        %361 = vmatprep.subr.bf16.mxu0 0
        %362 = vmatpush1.bf16.msra.mxu0 0
        %363 = vmatprep.subr.bf16.mxu0 0
        %364 = vmatpush1.bf16.msra.mxu0 0
        %365 = vmatprep.subr.bf16.mxu0 0
        %366 = vmatpush1.bf16.msra.mxu0 0
        %367 = vmatprep.subr.bf16.mxu0 0
        %368 = vmatpush1.bf16.msra.mxu0 0
        %369 = vmatprep.subr.bf16.mxu0 0
        %370 = vmatpush1.bf16.msra.mxu0 0
        %371 = vmatprep.subr.bf16.mxu0 0
        %372 = vmatpush1.bf16.msra.mxu0 0
        %373 = vmatprep.subr.bf16.mxu0 0
        %374 = vmatpush1.bf16.msra.mxu0 0
        %375 = vmatprep.mubr.bf16.mxu0 0
        %376 = vmatmul.mubr.bf16.gmra.mrb[0].mxu0 %v341
        %v377 = vpop.f32.mrb[0].mxu0
        %v378 = vadd.f32 %v313, %v377
        %v379 = vpop.f32.mrb[0].mxu0
        %v380 = vpop.f32.mrb[0].mxu0
        %v381 = vpop.f32.mrb[0].mxu0
        %382 = vdwg.mxu0
        %v383 = vmul.f32 %v378, %v378
        %v384 = vmul.f32 %v378, %v383
        %v385 = vmul.f32 %v384, 0.044715
        %v386 = vadd.f32 %v378, %v385
        %v387 = vmul.f32 %v386, 0.7978846
        %v388 = vtanh.pop %v387
        %v389 = vadd.f32 %v388, 1.0
        %v390 = vmul.f32 %v389, 0.5
        %v391 = vmul.f32 %v378, %v390
        %392 = vst.msk [vmem:[%s215] sm:$0xff] %vm246, %v391
        %s393 = sand.u32 %s137, 1
        %s394 = scalar_lea.sflag [#allocation3], %s393
        %s395 = sand.u32 %s137, 1
        %s396 = smul.addr %s395, 8
        %s397 = scalar_lea.vmem [#allocation2], %s396
        // Predicated region
        $region41: #{mlp_forward.1} parent=39 // pred_check
          %p398 = pneg %p147
        $region42: #{mlp_forward.1} parent=39 // pred_check_branch
          %400 = sbr.rel (%p398) target = $region44
        $region43: #{mlp_forward.1} parent=39 // pred_region
          %s402 = ssub.s32 128, 128
          %403 = vsyncadd %s394, %s402
          %s404 = smul.addr %s19, 128
          %s405 = scalar_lea.hbm %s5, %s404
          %s407 = sshll.u32 %s397, 4
          %s408 = int_to_ptr.vmem [resolvable:$true] %s407
          %410 = dma.vmem_to_hbm [thread:$0]  %s408, 128, %s405, %s394
        $region44: #{mlp_forward.1} parent=39 // pred_fallthru
          _
      $region40: #{mlp_forward.1} parent=5 // pred_fallthru
        _
      %p411 = scmp.le.s32.totalorder 2, %s14
      // Predicated region
      $region45: #{mlp_forward.1} parent=5 // pred_check
        %p412 = pneg %p411
      $region46: #{mlp_forward.1} parent=5 // pred_check_branch
        %414 = sbr.rel (%p412) target = $region48
      $region47: #{mlp_forward.1} parent=5 // pred_region
        %s415 = ssub.s32 %s14, 2
        // Predicated region
        $region49: #{mlp_forward.1} parent=47 // pred_check
          %p416 = pneg %p153
        $region50: #{mlp_forward.1} parent=47 // pred_check_branch
          %418 = sbr.rel (%p416) target = $region52
        $region51: #{mlp_forward.1} parent=47 // pred_region
          %s419 = sand.u32 %s138, 1
          %s420 = scalar_lea.sflag [#allocation3], %s419
          %s421 = sand.u32 %s138, 1
          %s422 = smul.addr %s421, 8
          %s423 = scalar_lea.vmem [#allocation2], %s422
          %424 = dma.done %s420, 128
        $region52: #{mlp_forward.1} parent=47 // pred_fallthru
          _
      $region48: #{mlp_forward.1} parent=5 // pred_fallthru
        _
    $region6: #{mlp_forward.1} parent=1 // loop_footer
      %s18 = sadd.s32 1, %s14
    $region7: #{mlp_forward.1} parent=1 // loop_footer_branch
      %13 = sbr.rel target = $region3
    $region8: #{mlp_forward.1} parent=1 // loop_exit
      _
    %425 = vsyncpa [#allocation3], 1
    %s426 = scalar_lea.sflag [#allocation3], 1
    %427 = vsyncpa %s426, 1

</llo_original>
